<compile_context>
chip_gen: v6e
topology: v6e:2x2x1
jax: 0.10.0
libtpu: 0.0.40
codegen_flags: <defaults>
</compile_context>

<pallas_src>
import math

import jax
import jax.numpy as jnp
from jax.experimental import pallas as pl
from jax.experimental.pallas import tpu as pltpu

_MIB = 1 << 20

# per-generation: (target bytes per pipeline buffer, scoped-VMEM default, physical VMEM)
_GEN_VMEM = {
    5: (int(2.5 * _MIB), 16 * _MIB, 128 * _MIB),
    6: (6 * _MIB,        32 * _MIB, 128 * _MIB),
    7: (5 * _MIB,        32 * _MIB,  64 * _MIB),
}


def _inverse_flow_kernel(x_ref, s_ref, t_ref, y_ref):
    # x_ref/y_ref: (TB, TD) tile; s_ref/t_ref: (1, TD) blocks (broadcast over rows).
    x = x_ref[...]
    s = s_ref[...]
    t = t_ref[...]
    # Elementwise hot path: sub/mul on the VPU, exp on the EUP (free slot).
    y_ref[...] = ((x - t) * jnp.exp(-s)).astype(y_ref.dtype)


def _tpu_generation():
    """Best-effort TPU generation (5/6/7); conservative (5) if unknown."""
    try:
        kind = jax.devices()[0].device_kind.lower()
    except Exception:
        return 5
    for g in (7, 6, 5):
        if (f"v{g}" in kind) or (f"tpu{g}" in kind):
            return g
    return 5


def _sublane_align(itemsize):
    if itemsize >= 4:
        return 8
    if itemsize == 2:
        return 16
    return 32


def _lane_densify(B, D):
    """Return k so that reshaping (B, D) -> (B//k, k*D) makes the last dim a
    multiple of 128 (ideally >= 512 lanes).  k = 1 if not possible/needed."""
    if D >= 128 and D % 128 == 0:
        return 1
    k = 128 // math.gcd(D, 128)           # smallest k with (k*D) % 128 == 0
    if k == 1 or B % k != 0:
        return 1
    while k * D < 512 and B % (2 * k) == 0:
        k *= 2
    return k


def _choose_tiles(B, D, itemsize, gen):
    """Pick (batch_tile, feature_tile, vmem_limit_bytes) for this generation."""
    target, scoped_default, physical = _GEN_VMEM.get(gen, _GEN_VMEM[5])
    align = _sublane_align(itemsize)

    # Feature-axis (lane) tiling only when D is so wide that even a minimal
    # row block would overflow the per-buffer budget.
    if D <= 128 or align * D * itemsize <= target:
        td = D
    else:
        td = (target // (align * itemsize)) // 128 * 128
        td = max(128, min(td, D))

    # Batch-axis tiling: fill the per-buffer budget; no artificial row cap.
    tb = target // max(1, td * itemsize)
    tb = max(align, (tb // align) * align)
    if tb >= B:
        tb = B

    # v7x: ensure >= 2 batch tiles on small batches so both TensorCores work.
    if gen == 7 and tb >= B and B >= 2 * align and td == D:
        half = -(-B // 2)                     # ceil(B / 2)
        tb2 = -(-half // align) * align       # round up to sublane align
        if tb2 < B:
            tb = tb2

    # Explicit scoped-VMEM limit sized to the double-buffered pipeline
    # (2x input tile + 2x output tile + params), capped below physical VMEM.
    tile_bytes = tb * td * itemsize
    param_bytes = 2 * 2 * td * 4              # s, t (<= f32), double-buffered
    need = 4 * tile_bytes + param_bytes
    vmem_limit = int(min(physical * 3 // 4, max(scoped_default, 2 * need)))
    return tb, td, vmem_limit


def inverse_flow_forward(x, s, t):
    """InverseFlow.forward(x) == base_flow.inverse(x).

    Args:
      x: [batch, dim] input samples.
      s: [dim] log-scale of the base affine flow.
      t: [dim] shift of the base affine flow.
    Returns:
      y:            [batch, dim] transformed samples.
      log_det_jac:  [batch] log-determinant of the Jacobian of this forward
                    (i.e. the base flow's inverse) transformation.
    """
    B, D = x.shape
    gen = _tpu_generation()
    itemsize = jnp.dtype(x.dtype).itemsize

    # Lane-density: fold k batch rows into one row when D is not a multiple of
    # 128 so the output stream uses unmasked full-vreg stores.
    k = _lane_densify(B, D)
    Bk, Dk = B // k, k * D

    # Keep bf16/f16 math native on v6e/v7x (bf16 VALU); f32 elsewhere.
    if gen >= 6 and (x.dtype == jnp.bfloat16 or x.dtype == jnp.float16):
        compute_dtype = x.dtype
    else:
        compute_dtype = jnp.float32

    x_in = x.reshape(Bk, Dk)
    s_row = jnp.tile(s.reshape(1, D), (1, k)).astype(compute_dtype)
    t_row = jnp.tile(t.reshape(1, D), (1, k)).astype(compute_dtype)

    tb, td, vmem_limit = _choose_tiles(Bk, Dk, itemsize, gen)
    grid = (pl.cdiv(Bk, tb), pl.cdiv(Dk, td))

    y = pl.pallas_call(
        _inverse_flow_kernel,
        out_shape=jax.ShapeDtypeStruct((Bk, Dk), x.dtype),
        grid=grid,
        in_specs=[
            pl.BlockSpec((tb, td), lambda i, j: (i, j)),   # x: streamed tiles
            pl.BlockSpec((1, td), lambda i, j: (0, j)),    # s: per-feature-tile
            pl.BlockSpec((1, td), lambda i, j: (0, j)),    # t: per-feature-tile
        ],
        out_specs=pl.BlockSpec((tb, td), lambda i, j: (i, j)),
        compiler_params=pltpu.CompilerParams(
            dimension_semantics=("parallel", "parallel"),  # megacore on v7x
            vmem_limit_bytes=vmem_limit,
        ),
    )(x_in, s_row, t_row)

    y = y.reshape(B, D)
    # log|det J| of the inverse transform is independent of x; compute it with
    # plain JAX (a D-length reduction) and broadcast per batch row.
    log_det_jac = jnp.broadcast_to(-jnp.sum(s.astype(jnp.float32)), (B,))
    return y, log_det_jac


def _reference(x, s, t):
    # Pure-JAX reference of InverseFlow.forward with the affine base flow.
    y = (x - t[None, :]) * jnp.exp(-s)[None, :]
    log_det_jac = jnp.broadcast_to(-jnp.sum(s), (x.shape[0],))
    return y, log_det_jac


if __name__ == "__main__":
    key = jax.random.PRNGKey(0)
    kx, ks, kt = jax.random.split(key, 3)

    batch, dim = 8, 128
    x = jax.random.normal(kx, (batch, dim), dtype=jnp.float32)
    # Deterministic synthetic parameters for the base affine flow.
    s = 0.1 * jax.random.normal(ks, (dim,), dtype=jnp.float32)
    t = 0.5 * jax.random.normal(kt, (dim,), dtype=jnp.float32)

    y, log_det_jac = inverse_flow_forward(x, s, t)
    jax.block_until_ready((y, log_det_jac))

    y_ref, ld_ref = _reference(x, s, t)
    assert y.shape == (batch, dim)
    assert log_det_jac.shape == (batch,)
    assert jnp.allclose(y, y_ref, atol=1e-5, rtol=1e-5)
    assert jnp.allclose(log_det_jac, ld_ref, atol=1e-5, rtol=1e-5)

    print("KERNEL_OK")
</pallas_src>

<mosaic_0001>
module attributes {stable_mosaic.version = 11 : i64} {
  func.func @_inverse_flow_kernel(%arg0: i32, %arg1: i32, %arg2: memref<8x128xf32, #tpu.memory_space<vmem>>, %arg3: memref<1x128xf32, #tpu.memory_space<vmem>>, %arg4: memref<1x128xf32, #tpu.memory_space<vmem>>, %arg5: memref<8x128xf32, #tpu.memory_space<vmem>>) attributes {dimension_semantics = [#tpu.dimension_semantics<parallel>, #tpu.dimension_semantics<parallel>], iteration_bounds = array<i64: 1, 1>, scalar_prefetch = 0 : i64, scratch_operands = 0 : i64, tpu.core_type = #tpu.core_type<tc>, window_params = [{transform_indices = @transform_0, window_bounds = array<i64: 8, 128>}, {transform_indices = @transform_1, window_bounds = array<i64: 1, 128>}, {transform_indices = @transform_2, window_bounds = array<i64: 1, 128>}, {transform_indices = @transform_3, window_bounds = array<i64: 8, 128>}]} {
    %c0 = arith.constant 0 : index
    %c0_0 = arith.constant 0 : index
    %0 = vector.load %arg2[%c0, %c0_0] : memref<8x128xf32, #tpu.memory_space<vmem>>, vector<8x128xf32>
    %c0_1 = arith.constant 0 : index
    %c0_2 = arith.constant 0 : index
    %1 = vector.load %arg3[%c0_1, %c0_2] : memref<1x128xf32, #tpu.memory_space<vmem>>, vector<1x128xf32>
    %c0_3 = arith.constant 0 : index
    %c0_4 = arith.constant 0 : index
    %2 = vector.load %arg4[%c0_3, %c0_4] : memref<1x128xf32, #tpu.memory_space<vmem>>, vector<1x128xf32>
    %3 = vector.broadcast %2 : vector<1x128xf32> to vector<8x128xf32>
    %4 = arith.subf %0, %3 : vector<8x128xf32>
    %cst = arith.constant 0.000000e+00 : f32
    %5 = vector.broadcast %cst : f32 to vector<1x128xf32>
    %6 = arith.subf %5, %1 : vector<1x128xf32>
    %7 = math.exp %6 : vector<1x128xf32>
    %8 = vector.broadcast %7 : vector<1x128xf32> to vector<8x128xf32>
    %9 = arith.mulf %4, %8 : vector<8x128xf32>
    %c0_5 = arith.constant 0 : index
    %c0_6 = arith.constant 0 : index
    %10 = vector.load %arg5[%c0_5, %c0_6] : memref<8x128xf32, #tpu.memory_space<vmem>>, vector<8x128xf32>
    tpu.vector_store %arg5[%c0_5, %c0_6], %9 {strides = array<i32>} : memref<8x128xf32, #tpu.memory_space<vmem>>, vector<8x128xf32>,
    return
  }
  func.func @transform_0(%arg0: i32, %arg1: i32) -> (i32, i32) {
    %c0_i32 = arith.constant 0 : i32
    return %arg0, %arg1 : i32, i32
  }
  func.func @transform_1(%arg0: i32, %arg1: i32) -> (i32, i32) {
    %c0_i32 = arith.constant 0 : i32
    %c0_i32_0 = arith.constant 0 : i32
    return %c0_i32, %arg1 : i32, i32
  }
  func.func @transform_2(%arg0: i32, %arg1: i32) -> (i32, i32) {
    %c0_i32 = arith.constant 0 : i32
    %c0_i32_0 = arith.constant 0 : i32
    return %c0_i32, %arg1 : i32, i32
  }
  func.func @transform_3(%arg0: i32, %arg1: i32) -> (i32, i32) {
    %c0_i32 = arith.constant 0 : i32
    return %arg0, %arg1 : i32, i32
  }
}

</mosaic_0001>

<llo_original>
// kernel: tpu_custom_call.1
$region0: #{tpu_custom_call.1}
  #allocation0 [shape = 'u32[]', space=smem, size = 0x4, offset = 0x4, fixed_abs, tag = 'smem constant byte address 0x4 - core index']
  #allocation1 [shape = 'u32[144,128]{1,0:T(1,128)}', space=vmem, size = 0x12000, scoped, tag = 'internal scratch']
  %s0 = inlined_call_operand.hbm [shape: f32[8,128], index: 0, kind: input, shape index: {}]
  %s1 = inlined_call_operand.vmem [shape: f32[1,128], index: 1, kind: input, shape index: {}]
  %s2 = inlined_call_operand.vmem [shape: f32[1,128], index: 2, kind: input, shape index: {}]
  %s3 = inlined_call_operand.hbm [shape: f32[8,128], index: 3, kind: output, shape index: {}]
  %s4 = sld [smem:[#allocation0]]
  $region26: #{tpu_custom_call.1} parent=0
    _
  %s6 = ssub.s32 1, %s4
  %s7 = scalar_select 0, %s6, %s4
  $region1: #{tpu_custom_call.1} parent=0
    #allocation2 [shape = 'u8[4096]{0}', space=vmem, size = 0x1000, scoped, tag = 'input window, operand 0, single buffered']
    #allocation3 [shape = 's32[1]{0}', space=sflag, size = 0x4, scoped, tag = 'scoped memory for tpu_custom_call.1']
    #allocation4 [shape = 's32[1]{0}', space=sflag, size = 0x4, scoped, tag = 'scoped memory for tpu_custom_call.1']
    #allocation5 [shape = 'u8[4096]{0}', space=vmem, size = 0x1000, scoped, tag = 'output window, operand 0, single buffered']
    %8 = vsyncpa [#allocation3], 0
    %9 = vsyncpa [#allocation4], 0
    // Predicated region
    $region2: #{tpu_custom_call.1} parent=1 // pred_check
      _
    $region3: #{tpu_custom_call.1} parent=1 // pred_check_branch
      %11 = sbr.rel (0) target = $region5
    $region4: #{tpu_custom_call.1} parent=1 // pred_region
      %s13 = ssub.s32 128, 128
      %14 = vsyncadd [#allocation3], %s13
      %s16 = sshll.u32 [#allocation2], 4
      %s17 = int_to_ptr.vmem [resolvable:$true] %s16
      %19 = dma.hbm_to_vmem [thread:$0]  %s0, 128, %s17, [#allocation3]
    $region5: #{tpu_custom_call.1} parent=1 // pred_fallthru
      _
    // Predicated region
    $region6: #{tpu_custom_call.1} parent=1 // pred_check
      _
    $region7: #{tpu_custom_call.1} parent=1 // pred_check_branch
      %21 = sbr.rel (0) target = $region9
    $region8: #{tpu_custom_call.1} parent=1 // pred_region
      _
    $region9: #{tpu_custom_call.1} parent=1 // pred_fallthru
      _
    // Predicated region
    $region10: #{tpu_custom_call.1} parent=1 // pred_check
      _
    $region11: #{tpu_custom_call.1} parent=1 // pred_check_branch
      %23 = sbr.rel (0) target = $region13
    $region12: #{tpu_custom_call.1} parent=1 // pred_region
      _
    $region13: #{tpu_custom_call.1} parent=1 // pred_fallthru
      _
    // Predicated region
    $region14: #{tpu_custom_call.1} parent=1 // pred_check
      _
    $region15: #{tpu_custom_call.1} parent=1 // pred_check_branch
      %25 = sbr.rel (0) target = $region17
    $region16: #{tpu_custom_call.1} parent=1 // pred_region
      %26 = dma.done [#allocation3], 128
    $region17: #{tpu_custom_call.1} parent=1 // pred_fallthru
      _
    %v27 = vld [vmem:[#allocation2] sm:$0xff]
    %v28 = vld [vmem:[%s1] sm:$0x1]
    %v29 = vld [vmem:[%s2] sm:$0x1]
    %v31 = vlaneseq
    %v32 = vshrl.u32 %v31, 7
    %v33 = vsub.s32 0, %v32
    %v34 = vrot.slane %v29, %v33
    %v36 = vsub.f32 %v27, %v34
    %v37 = vsub.f32 0.0, %v28
    %v38 = vmul.f32 %v37, 1.442695
    %v39 = vpow.pop %v38
    %v41 = vlaneseq
    %v42 = vshrl.u32 %v41, 7
    %v43 = vsub.s32 0, %v42
    %v44 = vrot.slane %v39, %v43
    %v46 = vmul.f32 %v36, %v44
    %47 = vst [vmem:[#allocation5] sm:$0xff] %v46
    // Predicated region
    $region18: #{tpu_custom_call.1} parent=1 // pred_check
      _
    $region19: #{tpu_custom_call.1} parent=1 // pred_check_branch
      %49 = sbr.rel (0) target = $region21
    $region20: #{tpu_custom_call.1} parent=1 // pred_region
      %s51 = ssub.s32 128, 128
      %52 = vsyncadd [#allocation4], %s51
      %s54 = sshll.u32 [#allocation5], 4
      %s55 = int_to_ptr.vmem [resolvable:$true] %s54
      %57 = dma.vmem_to_hbm [thread:$0]  %s55, 128, %s3, [#allocation4]
    $region21: #{tpu_custom_call.1} parent=1 // pred_fallthru
      _
    // Predicated region
    $region22: #{tpu_custom_call.1} parent=1 // pred_check
      _
    $region23: #{tpu_custom_call.1} parent=1 // pred_check_branch
      %59 = sbr.rel (0) target = $region25
    $region24: #{tpu_custom_call.1} parent=1 // pred_region
      %60 = dma.done [#allocation4], 128
    $region25: #{tpu_custom_call.1} parent=1 // pred_fallthru
      _
    %61 = vsyncpa [#allocation3], 1
    %62 = vsyncpa [#allocation4], 1

</llo_original>
